<compile_context>
chip_gen: v7x
topology: tpu7x:2x2x1
jax: 0.10.0
libtpu: 0.0.40
codegen_flags: <defaults>
</compile_context>

<pallas_src>
import jax
import jax.numpy as jnp
from jax.experimental import pallas as pl
from jax.experimental.pallas import tpu as pltpu


def deep_kernel(x_ref,
                w1_ref, b1_ref,
                w2_ref, b2_ref,
                w3_ref, b3_ref,
                w4_ref, b4_ref,
                o_ref):
    x = x_ref[...]  # (TB, 320) bf16

    # layer1 + ReLU   (TB,320)@(320,180) -> (TB,180), f32 accumulate
    h1 = jnp.dot(x, w1_ref[...], preferred_element_type=jnp.float32) + b1_ref[...]
    h1 = jnp.maximum(h1, 0.0)

    # layer2 + ReLU   (TB,180)@(180,60) -> (TB,60)
    h2 = jnp.dot(h1.astype(jnp.bfloat16), w2_ref[...],
                 preferred_element_type=jnp.float32) + b2_ref[...]
    h2 = jnp.maximum(h2, 0.0)

    # layer3 + ReLU   (TB,60)@(60,30) -> (TB,30)
    h3 = jnp.dot(h2.astype(jnp.bfloat16), w3_ref[...],
                 preferred_element_type=jnp.float32) + b3_ref[...]
    h3 = jnp.maximum(h3, 0.0)

    # output layer (30 -> 1): VPU multiply + lane reduction (skip the N=1 MXU matmul)
    z = jnp.sum(h3 * w4_ref[...], axis=-1, keepdims=True) + b4_ref[...]

    # sigmoid via EUP exp + approx reciprocal (EUP slot, frees VALU)
    o_ref[...] = pl.reciprocal(1.0 + jnp.exp(-z), approx=True).astype(o_ref.dtype)


def deep_forward(x, params, *, tb_max=2048):
    """x: (B, 320) float32.  params: dict of transposed weights / biases (f32)."""
    B = x.shape[0]
    # Batch tile: large for throughput, but never larger than the (8-rounded) batch.
    TB = min(tb_max, pl.cdiv(B, 8) * 8)
    B_pad = pl.cdiv(B, TB) * TB
    if B_pad != B:
        x = jnp.pad(x, ((0, B_pad - B), (0, 0)))

    # bf16 for the HBM-dominant stream (x) and the MXU weights; biases stay f32.
    x_bf = x.astype(jnp.bfloat16)
    w1 = params["w1"].astype(jnp.bfloat16)
    w2 = params["w2"].astype(jnp.bfloat16)
    w3 = params["w3"].astype(jnp.bfloat16)
    w4 = params["w4"].reshape(1, 30).astype(jnp.float32)   # VPU path, keep f32
    b4 = params["b4"].reshape(1, 1).astype(jnp.float32)

    grid = (B_pad // TB,)
    const2d = lambda i: (0, 0)   # weights/biases stay resident across grid steps

    in_specs = [
        pl.BlockSpec((TB, 320), lambda i: (i, 0)),   # x: streamed per batch tile
        pl.BlockSpec((320, 180), const2d), pl.BlockSpec((1, 180), const2d),
        pl.BlockSpec((180, 60), const2d), pl.BlockSpec((1, 60), const2d),
        pl.BlockSpec((60, 30), const2d), pl.BlockSpec((1, 30), const2d),
        pl.BlockSpec((1, 30), const2d), pl.BlockSpec((1, 1), const2d),
    ]
    out_specs = pl.BlockSpec((TB, 1), lambda i: (i, 0))

    flops = 2 * B_pad * (320 * 180 + 180 * 60 + 60 * 30 + 30)
    weight_bytes = (320 * 180 + 180 * 60 + 60 * 30) * 2 + 30 * 4 + (180 + 60 + 30 + 1) * 4
    bytes_accessed = B_pad * 320 * 2 + weight_bytes + B_pad * 4

    out = pl.pallas_call(
        deep_kernel,
        out_shape=jax.ShapeDtypeStruct((B_pad, 1), jnp.float32),
        grid_spec=pltpu.PrefetchScalarGridSpec(
            num_scalar_prefetch=0,
            grid=grid,
            in_specs=in_specs,
            out_specs=out_specs,
        ),
        compiler_params=pltpu.CompilerParams(
            dimension_semantics=("parallel",)),
        cost_estimate=pl.CostEstimate(
            flops=flops,
            transcendentals=B_pad,
            bytes_accessed=bytes_accessed),
    )(x_bf, w1, params["b1"], w2, params["b2"], w3, params["b3"], w4, b4)

    return out[:B]


def init_params(key):
    """Deterministic init mimicking PyTorch nn.Linear default (U[-1/sqrt(in), 1/sqrt(in)])."""
    dims = [(320, 180), (180, 60), (60, 30), (30, 1)]
    params = {}
    for i, (fan_in, fan_out) in enumerate(dims, start=1):
        key, kw, kb = jax.random.split(key, 3)
        bound = 1.0 / jnp.sqrt(fan_in)
        # stored already transposed: (in, out)
        params[f"w{i}"] = jax.random.uniform(
            kw, (fan_in, fan_out), jnp.float32, minval=-bound, maxval=bound)
        params[f"b{i}"] = jax.random.uniform(
            kb, (1, fan_out), jnp.float32, minval=-bound, maxval=bound)
    return params


def deep_reference(x, params):
    h = jnp.maximum(x @ params["w1"] + params["b1"], 0.0)
    h = jnp.maximum(h @ params["w2"] + params["b2"], 0.0)
    h = jnp.maximum(h @ params["w3"] + params["b3"], 0.0)
    return jax.nn.sigmoid(h @ params["w4"] + params["b4"])


if __name__ == "__main__":
    key = jax.random.PRNGKey(0)
    key, kx = jax.random.split(key)
    B = 8
    x = jax.random.normal(kx, (B, 320), jnp.float32)
    params = init_params(key)

    out = deep_forward(x, params)
    out = jax.block_until_ready(out)

    ref = deep_reference(x, params)
    assert out.shape == (B, 1)
    # bf16 inputs/weights + approx reciprocal -> relaxed tolerance vs f32 reference.
    assert jnp.allclose(out, ref, atol=2e-2, rtol=2e-2), (
        f"max abs err = {jnp.max(jnp.abs(out - ref))}")
    print("KERNEL_OK")
</pallas_src>

<mosaic_0001>
module attributes {stable_mosaic.version = 11 : i64} {
  func.func @deep_kernel(%arg0: i32, %arg1: memref<8x320xbf16, #tpu.memory_space<vmem>>, %arg2: memref<320x180xbf16, #tpu.memory_space<vmem>>, %arg3: memref<1x180xf32, #tpu.memory_space<vmem>>, %arg4: memref<180x60xbf16, #tpu.memory_space<vmem>>, %arg5: memref<1x60xf32, #tpu.memory_space<vmem>>, %arg6: memref<60x30xbf16, #tpu.memory_space<vmem>>, %arg7: memref<1x30xf32, #tpu.memory_space<vmem>>, %arg8: memref<1x30xf32, #tpu.memory_space<vmem>>, %arg9: memref<1x1xf32, #tpu.memory_space<vmem>>, %arg10: memref<8x1xf32, #tpu.memory_space<vmem>>) attributes {dimension_semantics = [#tpu.dimension_semantics<parallel>], iteration_bounds = array<i64: 1>, scalar_prefetch = 0 : i64, scratch_operands = 0 : i64, tpu.core_type = #tpu.core_type<tc>, window_params = [{transform_indices = @transform_0, window_bounds = array<i64: 8, 320>}, {pipeline_mode = #tpu.pipeline_mode<synchronous>, transform_indices = @transform_1, window_bounds = array<i64: 320, 180>}, {pipeline_mode = #tpu.pipeline_mode<synchronous>, transform_indices = @transform_2, window_bounds = array<i64: 1, 180>}, {pipeline_mode = #tpu.pipeline_mode<synchronous>, transform_indices = @transform_3, window_bounds = array<i64: 180, 60>}, {pipeline_mode = #tpu.pipeline_mode<synchronous>, transform_indices = @transform_4, window_bounds = array<i64: 1, 60>}, {pipeline_mode = #tpu.pipeline_mode<synchronous>, transform_indices = @transform_5, window_bounds = array<i64: 60, 30>}, {pipeline_mode = #tpu.pipeline_mode<synchronous>, transform_indices = @transform_6, window_bounds = array<i64: 1, 30>}, {pipeline_mode = #tpu.pipeline_mode<synchronous>, transform_indices = @transform_7, window_bounds = array<i64: 1, 30>}, {pipeline_mode = #tpu.pipeline_mode<synchronous>, transform_indices = @transform_8, window_bounds = array<i64: 1, 1>}, {transform_indices = @transform_9, window_bounds = array<i64: 8, 1>}]} {
    %c0 = arith.constant 0 : index
    %c0_0 = arith.constant 0 : index
    %0 = vector.load %arg1[%c0, %c0_0] : memref<8x320xbf16, #tpu.memory_space<vmem>>, vector<8x320xbf16>
    %c0_1 = arith.constant 0 : index
    %c0_2 = arith.constant 0 : index
    %1 = vector.load %arg2[%c0_1, %c0_2] : memref<320x180xbf16, #tpu.memory_space<vmem>>, vector<320x180xbf16>
    %cst = arith.constant dense<0.000000e+00> : vector<8x180xf32>
    %2 = tpu.matmul %0, %1, %cst {dimension_numbers = #tpu.dot_dimension_numbers<[1], [0], [0], [1], [0, 0, 1, 1], [], []>} : vector<8x320xbf16>, vector<320x180xbf16>, vector<8x180xf32> -> vector<8x180xf32>
    %c0_3 = arith.constant 0 : index
    %c0_4 = arith.constant 0 : index
    %3 = vector.load %arg3[%c0_3, %c0_4] : memref<1x180xf32, #tpu.memory_space<vmem>>, vector<1x180xf32>
    %4 = vector.broadcast %3 : vector<1x180xf32> to vector<8x180xf32>
    %5 = arith.addf %2, %4 : vector<8x180xf32>
    %cst_5 = arith.constant 0.000000e+00 : f32
    %6 = vector.broadcast %cst_5 : f32 to vector<8x180xf32>
    %7 = arith.maximumf %5, %6 : vector<8x180xf32>
    %8 = arith.truncf %7 : vector<8x180xf32> to vector<8x180xbf16>
    %c0_6 = arith.constant 0 : index
    %c0_7 = arith.constant 0 : index
    %9 = vector.load %arg4[%c0_6, %c0_7] : memref<180x60xbf16, #tpu.memory_space<vmem>>, vector<180x60xbf16>
    %cst_8 = arith.constant dense<0.000000e+00> : vector<8x60xf32>
    %10 = tpu.matmul %8, %9, %cst_8 {dimension_numbers = #tpu.dot_dimension_numbers<[1], [0], [0], [1], [0, 0, 1, 1], [], []>} : vector<8x180xbf16>, vector<180x60xbf16>, vector<8x60xf32> -> vector<8x60xf32>
    %c0_9 = arith.constant 0 : index
    %c0_10 = arith.constant 0 : index
    %11 = vector.load %arg5[%c0_9, %c0_10] : memref<1x60xf32, #tpu.memory_space<vmem>>, vector<1x60xf32>
    %12 = vector.broadcast %11 : vector<1x60xf32> to vector<8x60xf32>
    %13 = arith.addf %10, %12 : vector<8x60xf32>
    %cst_11 = arith.constant 0.000000e+00 : f32
    %14 = vector.broadcast %cst_11 : f32 to vector<8x60xf32>
    %15 = arith.maximumf %13, %14 : vector<8x60xf32>
    %16 = arith.truncf %15 : vector<8x60xf32> to vector<8x60xbf16>
    %c0_12 = arith.constant 0 : index
    %c0_13 = arith.constant 0 : index
    %17 = vector.load %arg6[%c0_12, %c0_13] : memref<60x30xbf16, #tpu.memory_space<vmem>>, vector<60x30xbf16>
    %cst_14 = arith.constant dense<0.000000e+00> : vector<8x30xf32>
    %18 = tpu.matmul %16, %17, %cst_14 {dimension_numbers = #tpu.dot_dimension_numbers<[1], [0], [0], [1], [0, 0, 1, 1], [], []>} : vector<8x60xbf16>, vector<60x30xbf16>, vector<8x30xf32> -> vector<8x30xf32>
    %c0_15 = arith.constant 0 : index
    %c0_16 = arith.constant 0 : index
    %19 = vector.load %arg7[%c0_15, %c0_16] : memref<1x30xf32, #tpu.memory_space<vmem>>, vector<1x30xf32>
    %20 = vector.broadcast %19 : vector<1x30xf32> to vector<8x30xf32>
    %21 = arith.addf %18, %20 : vector<8x30xf32>
    %cst_17 = arith.constant 0.000000e+00 : f32
    %22 = vector.broadcast %cst_17 : f32 to vector<8x30xf32>
    %23 = arith.maximumf %21, %22 : vector<8x30xf32>
    %c0_18 = arith.constant 0 : index
    %c0_19 = arith.constant 0 : index
    %24 = vector.load %arg8[%c0_18, %c0_19] : memref<1x30xf32, #tpu.memory_space<vmem>>, vector<1x30xf32>
    %25 = vector.broadcast %24 : vector<1x30xf32> to vector<8x30xf32>
    %26 = arith.mulf %23, %25 : vector<8x30xf32>
    %cst_20 = arith.constant dense<0.000000e+00> : vector<8xf32>
    %27 = vector.multi_reduction <add>, %26, %cst_20 [1] : vector<8x30xf32> to vector<8xf32>
    %28 = vector.shape_cast %27 : vector<8xf32> to vector<8x1xf32>
    %c0_21 = arith.constant 0 : index
    %c0_22 = arith.constant 0 : index
    %29 = vector.load %arg9[%c0_21, %c0_22] : memref<1x1xf32, #tpu.memory_space<vmem>>, vector<1x1xf32>
    %30 = vector.broadcast %29 : vector<1x1xf32> to vector<8x1xf32>
    %31 = arith.addf %28, %30 : vector<8x1xf32>
    %cst_23 = arith.constant 0.000000e+00 : f32
    %32 = vector.broadcast %cst_23 : f32 to vector<8x1xf32>
    %33 = arith.subf %32, %31 : vector<8x1xf32>
    %34 = math.exp %33 : vector<8x1xf32>
    %cst_24 = arith.constant 1.000000e+00 : f32
    %35 = vector.broadcast %cst_24 : f32 to vector<8x1xf32>
    %36 = arith.addf %35, %34 : vector<8x1xf32>
    %37 = tpu.reciprocal %36 {approx = true} : vector<8x1xf32> -> vector<8x1xf32>
    %c0_25 = arith.constant 0 : index
    %c0_26 = arith.constant 0 : index
    %38 = vector.load %arg10[%c0_25, %c0_26] : memref<8x1xf32, #tpu.memory_space<vmem>>, vector<8x1xf32>
    tpu.vector_store %arg10[%c0_25, %c0_26], %37 {strides = array<i32>} : memref<8x1xf32, #tpu.memory_space<vmem>>, vector<8x1xf32>,
    return
  }
  func.func @transform_0(%arg0: i32) -> (i32, i32) {
    %c0_i32 = arith.constant 0 : i32
    %c0_i32_0 = arith.constant 0 : i32
    return %arg0, %c0_i32 : i32, i32
  }
  func.func @transform_1(%arg0: i32) -> (i32, i32) {
    %c0_i32 = arith.constant 0 : i32
    %c0_i32_0 = arith.constant 0 : i32
    %c0_i32_1 = arith.constant 0 : i32
    return %c0_i32, %c0_i32_0 : i32, i32
  }
  func.func @transform_2(%arg0: i32) -> (i32, i32) {
    %c0_i32 = arith.constant 0 : i32
    %c0_i32_0 = arith.constant 0 : i32
    %c0_i32_1 = arith.constant 0 : i32
    return %c0_i32, %c0_i32_0 : i32, i32
  }
  func.func @transform_3(%arg0: i32) -> (i32, i32) {
    %c0_i32 = arith.constant 0 : i32
    %c0_i32_0 = arith.constant 0 : i32
    %c0_i32_1 = arith.constant 0 : i32
    return %c0_i32, %c0_i32_0 : i32, i32
  }
  func.func @transform_4(%arg0: i32) -> (i32, i32) {
    %c0_i32 = arith.constant 0 : i32
    %c0_i32_0 = arith.constant 0 : i32
    %c0_i32_1 = arith.constant 0 : i32
    return %c0_i32, %c0_i32_0 : i32, i32
  }
  func.func @transform_5(%arg0: i32) -> (i32, i32) {
    %c0_i32 = arith.constant 0 : i32
    %c0_i32_0 = arith.constant 0 : i32
    %c0_i32_1 = arith.constant 0 : i32
    return %c0_i32, %c0_i32_0 : i32, i32
  }
  func.func @transform_6(%arg0: i32) -> (i32, i32) {
    %c0_i32 = arith.constant 0 : i32
    %c0_i32_0 = arith.constant 0 : i32
    %c0_i32_1 = arith.constant 0 : i32
    return %c0_i32, %c0_i32_0 : i32, i32
  }
  func.func @transform_7(%arg0: i32) -> (i32, i32) {
    %c0_i32 = arith.constant 0 : i32
    %c0_i32_0 = arith.constant 0 : i32
    %c0_i32_1 = arith.constant 0 : i32
    return %c0_i32, %c0_i32_0 : i32, i32
  }
  func.func @transform_8(%arg0: i32) -> (i32, i32) {
    %c0_i32 = arith.constant 0 : i32
    %c0_i32_0 = arith.constant 0 : i32
    %c0_i32_1 = arith.constant 0 : i32
    return %c0_i32, %c0_i32_0 : i32, i32
  }
  func.func @transform_9(%arg0: i32) -> (i32, i32) {
    %c0_i32 = arith.constant 0 : i32
    %c0_i32_0 = arith.constant 0 : i32
    return %arg0, %c0_i32 : i32, i32
  }
}

</mosaic_0001>

<llo_original>
// kernel: tpu_custom_call.1
$region0: #{tpu_custom_call.1}
  #allocation0 [shape = 'u32[]', space=smem, size = 0x4, offset = 0x4, fixed_abs, tag = 'smem constant byte address 0x4 - core index']
  #allocation1 [shape = 'u32[144,128]{1,0:T(1,128)}', space=vmem, size = 0x12000, scoped, tag = 'internal scratch']
  #allocation2 [shape = 'f32[1,1]{1,0:T(1,128)S(1)}', space=vmem, size = 0x200, scoped, tag = 'scoped memory for tpu_custom_call.1']
  %s0 = inlined_call_operand.vmem [shape: bf16[8,320], index: 0, kind: input, shape index: {}]
  %s1 = inlined_call_operand.vmem [shape: bf16[320,180], index: 1, kind: input, shape index: {}]
  %s2 = inlined_call_operand.vmem [shape: f32[1,180], index: 2, kind: input, shape index: {}]
  %s3 = inlined_call_operand.vmem [shape: bf16[180,60], index: 3, kind: input, shape index: {}]
  %s4 = inlined_call_operand.vmem [shape: f32[1,60], index: 4, kind: input, shape index: {}]
  %s5 = inlined_call_operand.vmem [shape: bf16[60,30], index: 5, kind: input, shape index: {}]
  %s6 = inlined_call_operand.vmem [shape: f32[1,30], index: 6, kind: input, shape index: {}]
  %s7 = inlined_call_operand.vmem [shape: f32[1,30], index: 7, kind: input, shape index: {}]
  %s8 = inlined_call_operand.<no memory space> [shape: f32[1,1], index: 8, kind: input, shape index: {}]
  %s9 = inlined_call_operand.vmem [shape: f32[8,1], index: 9, kind: output, shape index: {}]
  %s10 = sld [smem:[#allocation0]]
  $region46: #{tpu_custom_call.1} parent=0
    _
  %s12 = ssub.s32 1, %s10
  %s13 = scalar_select 0, %s12, %s10
  %v14 = vstv %s8
  %15 = vst [vmem:[#allocation2] sm:$0x1] %v14
  // Predicated region
  $region2: #{tpu_custom_call.1} parent=0 // pred_check
    _
  $region3: #{tpu_custom_call.1} parent=0 // pred_check_branch
    %17 = sbr.rel (0) target = $region5
  $region4: #{tpu_custom_call.1} parent=0 // pred_region
    _
  $region5: #{tpu_custom_call.1} parent=0 // pred_fallthru
    _
  // Predicated region
  $region6: #{tpu_custom_call.1} parent=0 // pred_check
    _
  $region7: #{tpu_custom_call.1} parent=0 // pred_check_branch
    %19 = sbr.rel (0) target = $region9
  $region8: #{tpu_custom_call.1} parent=0 // pred_region
    _
  $region9: #{tpu_custom_call.1} parent=0 // pred_fallthru
    _
  // Predicated region
  $region10: #{tpu_custom_call.1} parent=0 // pred_check
    _
  $region11: #{tpu_custom_call.1} parent=0 // pred_check_branch
    %21 = sbr.rel (0) target = $region13
  $region12: #{tpu_custom_call.1} parent=0 // pred_region
    _
  $region13: #{tpu_custom_call.1} parent=0 // pred_fallthru
    _
  // Predicated region
  $region14: #{tpu_custom_call.1} parent=0 // pred_check
    _
  $region15: #{tpu_custom_call.1} parent=0 // pred_check_branch
    %23 = sbr.rel (0) target = $region17
  $region16: #{tpu_custom_call.1} parent=0 // pred_region
    _
  $region17: #{tpu_custom_call.1} parent=0 // pred_fallthru
    _
  // Predicated region
  $region18: #{tpu_custom_call.1} parent=0 // pred_check
    _
  $region19: #{tpu_custom_call.1} parent=0 // pred_check_branch
    %25 = sbr.rel (0) target = $region21
  $region20: #{tpu_custom_call.1} parent=0 // pred_region
    _
  $region21: #{tpu_custom_call.1} parent=0 // pred_fallthru
    _
  // Predicated region
  $region22: #{tpu_custom_call.1} parent=0 // pred_check
    _
  $region23: #{tpu_custom_call.1} parent=0 // pred_check_branch
    %27 = sbr.rel (0) target = $region25
  $region24: #{tpu_custom_call.1} parent=0 // pred_region
    _
  $region25: #{tpu_custom_call.1} parent=0 // pred_fallthru
    _
  // Predicated region
  $region26: #{tpu_custom_call.1} parent=0 // pred_check
    _
  $region27: #{tpu_custom_call.1} parent=0 // pred_check_branch
    %29 = sbr.rel (0) target = $region29
  $region28: #{tpu_custom_call.1} parent=0 // pred_region
    _
  $region29: #{tpu_custom_call.1} parent=0 // pred_fallthru
    _
  // Predicated region
  $region30: #{tpu_custom_call.1} parent=0 // pred_check
    _
  $region31: #{tpu_custom_call.1} parent=0 // pred_check_branch
    %31 = sbr.rel (0) target = $region33
  $region32: #{tpu_custom_call.1} parent=0 // pred_region
    _
  $region33: #{tpu_custom_call.1} parent=0 // pred_fallthru
    _
  // Predicated region
  $region34: #{tpu_custom_call.1} parent=0 // pred_check
    _
  $region35: #{tpu_custom_call.1} parent=0 // pred_check_branch
    %33 = sbr.rel (0) target = $region37
  $region36: #{tpu_custom_call.1} parent=0 // pred_region
    _
  $region37: #{tpu_custom_call.1} parent=0 // pred_fallthru
    _
  %v35 = vld [vmem:[%s0] sm:$0xff]
  %v36 = vld [vmem:[%s0 + $0x8] sm:$0xf]
  %v37 = vld [vmem:[%s1] sm:$0xff]
  %v38 = vld [vmem:[%s1 + $0x8] sm:$0xff]
  %v39 = vld [vmem:[%s1 + $0x10] sm:$0xff]
  %v40 = vld [vmem:[%s1 + $0x18] sm:$0xff]
  %v41 = vld [vmem:[%s1 + $0x20] sm:$0xff]
  %v42 = vld [vmem:[%s1 + $0x28] sm:$0xff]
  %v43 = vld [vmem:[%s1 + $0x30] sm:$0xff]
  %v44 = vld [vmem:[%s1 + $0x38] sm:$0xff]
  %v45 = vld [vmem:[%s1 + $0x40] sm:$0xff]
  %v46 = vld [vmem:[%s1 + $0x48] sm:$0xff]
  %v47 = vld [vmem:[%s1 + $0x50] sm:$0xff]
  %v48 = vld [vmem:[%s1 + $0x58] sm:$0xff]
  %v49 = vld [vmem:[%s1 + $0x60] sm:$0xff]
  %v50 = vld [vmem:[%s1 + $0x68] sm:$0xff]
  %v51 = vld [vmem:[%s1 + $0x70] sm:$0xff]
  %v52 = vld [vmem:[%s1 + $0x78] sm:$0xff]
  %v53 = vld [vmem:[%s1 + $0x80] sm:$0xff]
  %v54 = vld [vmem:[%s1 + $0x88] sm:$0xff]
  %v55 = vld [vmem:[%s1 + $0x90] sm:$0xff]
  %v56 = vld [vmem:[%s1 + $0x98] sm:$0xff]
  %v57 = vld [vmem:[%s1 + $0xa0] sm:$0xff]
  %v58 = vld [vmem:[%s1 + $0xa8] sm:$0xff]
  %v59 = vld [vmem:[%s1 + $0xb0] sm:$0xff]
  %v60 = vld [vmem:[%s1 + $0xb8] sm:$0xff]
  %v61 = vld [vmem:[%s1 + $0xc0] sm:$0xff]
  %v62 = vld [vmem:[%s1 + $0xc8] sm:$0xff]
  %v63 = vld [vmem:[%s1 + $0xd0] sm:$0xff]
  %v64 = vld [vmem:[%s1 + $0xd8] sm:$0xff]
  %v65 = vld [vmem:[%s1 + $0xe0] sm:$0xff]
  %v66 = vld [vmem:[%s1 + $0xe8] sm:$0xff]
  %v67 = vld [vmem:[%s1 + $0xf0] sm:$0xff]
  %v68 = vld [vmem:[%s1 + $0xf8] sm:$0xff]
  %v69 = vld [vmem:[%s1 + $0x100] sm:$0xff]
  %v70 = vld [vmem:[%s1 + $0x108] sm:$0xff]
  %v71 = vld [vmem:[%s1 + $0x110] sm:$0xff]
  %v72 = vld [vmem:[%s1 + $0x118] sm:$0xff]
  %v73 = vld [vmem:[%s1 + $0x120] sm:$0xff]
  %v74 = vld [vmem:[%s1 + $0x128] sm:$0xff]
  %v75 = vld [vmem:[%s1 + $0x130] sm:$0xff]
  %v76 = vld [vmem:[%s1 + $0x138] sm:$0xff]
  %v77 = vld [vmem:[%s2] sm:$0x3]
  %v79 = vlaneseq
  %v80 = vshrl.u32 %v79, 7
  %v81 = vsub.s32 0, %v80
  %v82 = vrot.slane %v77, %v81
  %v83 = vlaneseq
  %v84 = vshrl.u32 %v83, 7
  %v85 = vsub.s32 1, %v84
  %v86 = vrot.slane %v77, %v85
  %v91 = vunpack.c.l.b16 %v35
  %v92 = vunpack.c.h.b16 %v35
  %v93 = vunpack.c.l.b16 %v36
  %v94 = vpack.c.b16 %v91, %v91
  %v95 = vpack.c.b16 %v92, %v92
  %v96 = vpack.c.b16 %v93, %v93
  %v139 = vunpack.c.l.b16 %v37
  %v140 = vunpack.c.h.b16 %v37
  %v141 = vunpack.c.l.b16 %v38
  %v142 = vunpack.c.h.b16 %v38
  %v143 = vunpack.c.l.b16 %v39
  %v144 = vunpack.c.h.b16 %v39
  %v145 = vunpack.c.l.b16 %v40
  %v146 = vunpack.c.h.b16 %v40
  %v147 = vunpack.c.l.b16 %v41
  %v148 = vunpack.c.h.b16 %v41
  %v149 = vunpack.c.l.b16 %v42
  %v150 = vunpack.c.h.b16 %v42
  %v151 = vunpack.c.l.b16 %v43
  %v152 = vunpack.c.h.b16 %v43
  %v153 = vunpack.c.l.b16 %v44
  %v154 = vunpack.c.h.b16 %v44
  %v155 = vunpack.c.l.b16 %v45
  %v156 = vunpack.c.h.b16 %v45
  %v157 = vunpack.c.l.b16 %v46
  %v158 = vunpack.c.h.b16 %v46
  %v159 = vunpack.c.l.b16 %v47
  %v160 = vunpack.c.h.b16 %v47
  %v161 = vunpack.c.l.b16 %v48
  %v162 = vunpack.c.h.b16 %v48
  %v163 = vunpack.c.l.b16 %v49
  %v164 = vunpack.c.h.b16 %v49
  %v165 = vunpack.c.l.b16 %v50
  %v166 = vunpack.c.h.b16 %v50
  %v167 = vunpack.c.l.b16 %v51
  %v168 = vunpack.c.h.b16 %v51
  %v169 = vunpack.c.l.b16 %v52
  %v170 = vunpack.c.h.b16 %v52
  %v171 = vunpack.c.l.b16 %v53
  %v172 = vunpack.c.h.b16 %v53
  %v173 = vunpack.c.l.b16 %v54
  %v174 = vunpack.c.h.b16 %v54
  %v175 = vunpack.c.l.b16 %v55
  %v176 = vunpack.c.h.b16 %v55
  %v177 = vunpack.c.l.b16 %v56
  %v178 = vunpack.c.h.b16 %v56
  %v179 = vunpack.c.l.b16 %v57
  %v180 = vunpack.c.h.b16 %v57
  %v181 = vunpack.c.l.b16 %v58
  %v182 = vunpack.c.h.b16 %v58
  %v183 = vunpack.c.l.b16 %v59
  %v184 = vunpack.c.h.b16 %v59
  %v185 = vunpack.c.l.b16 %v60
  %v186 = vunpack.c.h.b16 %v60
  %v187 = vunpack.c.l.b16 %v61
  %v188 = vunpack.c.h.b16 %v61
  %v189 = vunpack.c.l.b16 %v62
  %v190 = vunpack.c.h.b16 %v62
  %v191 = vunpack.c.l.b16 %v63
  %v192 = vunpack.c.h.b16 %v63
  %v193 = vunpack.c.l.b16 %v64
  %v194 = vunpack.c.h.b16 %v64
  %v195 = vunpack.c.l.b16 %v65
  %v196 = vunpack.c.h.b16 %v65
  %v197 = vunpack.c.l.b16 %v66
  %v198 = vunpack.c.h.b16 %v66
  %v199 = vunpack.c.l.b16 %v67
  %v200 = vunpack.c.h.b16 %v67
  %v201 = vunpack.c.l.b16 %v68
  %v202 = vunpack.c.h.b16 %v68
  %v203 = vunpack.c.l.b16 %v69
  %v204 = vunpack.c.h.b16 %v69
  %v205 = vunpack.c.l.b16 %v70
  %v206 = vunpack.c.h.b16 %v70
  %v207 = vunpack.c.l.b16 %v71
  %v208 = vunpack.c.h.b16 %v71
  %v209 = vunpack.c.l.b16 %v72
  %v210 = vunpack.c.h.b16 %v72
  %v211 = vunpack.c.l.b16 %v73
  %v212 = vunpack.c.h.b16 %v73
  %v213 = vunpack.c.l.b16 %v74
  %v214 = vunpack.c.h.b16 %v74
  %v215 = vunpack.c.l.b16 %v75
  %v216 = vunpack.c.h.b16 %v75
  %v217 = vunpack.c.l.b16 %v76
  %v218 = vunpack.c.h.b16 %v76
  %v219 = vpack.c.b16 %v141, %v139
  %v220 = vpack.c.b16 %v142, %v140
  %v221 = vpack.c.b16 %v145, %v143
  %v222 = vpack.c.b16 %v146, %v144
  %v223 = vpack.c.b16 %v149, %v147
  %v224 = vpack.c.b16 %v150, %v148
  %v225 = vpack.c.b16 %v153, %v151
  %v226 = vpack.c.b16 %v154, %v152
  %v227 = vpack.c.b16 %v157, %v155
  %v228 = vpack.c.b16 %v158, %v156
  %v229 = vpack.c.b16 %v161, %v159
  %v230 = vpack.c.b16 %v162, %v160
  %v231 = vpack.c.b16 %v165, %v163
  %v232 = vpack.c.b16 %v166, %v164
  %v233 = vpack.c.b16 %v169, %v167
  %v234 = vpack.c.b16 %v170, %v168
  %v235 = vpack.c.b16 %v173, %v171
  %v236 = vpack.c.b16 %v174, %v172
  %v237 = vpack.c.b16 %v177, %v175
  %v238 = vpack.c.b16 %v178, %v176
  %v239 = vpack.c.b16 %v181, %v179
  %v240 = vpack.c.b16 %v182, %v180
  %v241 = vpack.c.b16 %v185, %v183
  %v242 = vpack.c.b16 %v186, %v184
  %v243 = vpack.c.b16 %v189, %v187
  %v244 = vpack.c.b16 %v190, %v188
  %v245 = vpack.c.b16 %v193, %v191
  %v246 = vpack.c.b16 %v194, %v192
  %v247 = vpack.c.b16 %v197, %v195
  %v248 = vpack.c.b16 %v198, %v196
  %v249 = vpack.c.b16 %v201, %v199
  %v250 = vpack.c.b16 %v202, %v200
  %v251 = vpack.c.b16 %v205, %v203
  %v252 = vpack.c.b16 %v206, %v204
  %v253 = vpack.c.b16 %v209, %v207
  %v254 = vpack.c.b16 %v210, %v208
  %v255 = vpack.c.b16 %v213, %v211
  %v256 = vpack.c.b16 %v214, %v212
  %v257 = vpack.c.b16 %v217, %v215
  %v258 = vpack.c.b16 %v218, %v216
  %vm299 = vcmask 523264
  %v301 = vsel %vm299, %v96, 0
  %303 = vmatprep.subr.bf16.mxu0 %v220
  %304 = vmatpush1.bf16.msra.mxu0 %v219
  %305 = vmatprep.subr.bf16.mxu0 %v222
  %306 = vmatpush1.bf16.msra.mxu0 %v221
  %307 = vmatprep.subr.bf16.mxu0 %v224
  %308 = vmatpush1.bf16.msra.mxu0 %v223
  %309 = vmatprep.subr.bf16.mxu0 %v226
  %310 = vmatpush1.bf16.msra.mxu0 %v225
  %311 = vmatprep.subr.bf16.mxu0 %v228
  %312 = vmatpush1.bf16.msra.mxu0 %v227
  %313 = vmatprep.subr.bf16.mxu0 %v230
  %314 = vmatpush1.bf16.msra.mxu0 %v229
  %315 = vmatprep.subr.bf16.mxu0 %v232
  %316 = vmatpush1.bf16.msra.mxu0 %v231
  %317 = vmatprep.subr.bf16.mxu0 %v234
  %318 = vmatpush1.bf16.msra.mxu0 %v233
  %319 = vmatprep.subr.bf16.mxu0 %v236
  %320 = vmatpush1.bf16.msra.mxu0 %v235
  %321 = vmatprep.subr.bf16.mxu0 %v238
  %322 = vmatpush1.bf16.msra.mxu0 %v237
  %323 = vmatprep.subr.bf16.mxu0 %v240
  %324 = vmatpush1.bf16.msra.mxu0 %v239
  %325 = vmatprep.subr.bf16.mxu0 %v242
  %326 = vmatpush1.bf16.msra.mxu0 %v241
  %327 = vmatprep.subr.bf16.mxu0 %v244
  %328 = vmatpush1.bf16.msra.mxu0 %v243
  %329 = vmatprep.subr.bf16.mxu0 %v246
  %330 = vmatpush1.bf16.msra.mxu0 %v245
  %331 = vmatprep.subr.bf16.mxu0 %v248
  %332 = vmatpush1.bf16.msra.mxu0 %v247
  %333 = vmatprep.subr.bf16.mxu0 %v250
  %334 = vmatpush1.bf16.msra.mxu0 %v249
  %335 = vmatprep.mubr.bf16.mxu0 %v95
  %336 = vmatmul.mubr.bf16.gmra.mrb[0].mxu0 %v94
  %v337 = vpop.f32.mrb[0].mxu0
  %v338 = vadd.f32 %v82, %v337
  %v339 = vpop.f32.mrb[0].mxu0
  %v340 = vadd.f32 %v86, %v339
  %v341 = vpop.f32.mrb[0].mxu0
  %v342 = vpop.f32.mrb[0].mxu0
  %343 = vdwg.mxu0
  %344 = vmatprep.subr.bf16.mxu0 %v252
  %345 = vmatpush1.bf16.msra.mxu0 %v251
  %346 = vmatprep.subr.bf16.mxu0 %v254
  %347 = vmatpush1.bf16.msra.mxu0 %v253
  %348 = vmatprep.subr.bf16.mxu0 %v256
  %349 = vmatpush1.bf16.msra.mxu0 %v255
  %350 = vmatprep.subr.bf16.mxu0 %v258
  %351 = vmatpush1.bf16.msra.mxu0 %v257
  %352 = vmatprep.subr.bf16.mxu0 0
  %353 = vmatpush1.bf16.msra.mxu0 0
  %354 = vmatprep.subr.bf16.mxu0 0
  %355 = vmatpush1.bf16.msra.mxu0 0
  %356 = vmatprep.subr.bf16.mxu0 0
  %357 = vmatpush1.bf16.msra.mxu0 0
  %358 = vmatprep.subr.bf16.mxu0 0
  %359 = vmatpush1.bf16.msra.mxu0 0
  %360 = vmatprep.subr.bf16.mxu0 0
  %361 = vmatpush1.bf16.msra.mxu0 0
  %362 = vmatprep.subr.bf16.mxu0 0
  %363 = vmatpush1.bf16.msra.mxu0 0
  %364 = vmatprep.subr.bf16.mxu0 0
  %365 = vmatpush1.bf16.msra.mxu0 0
  %366 = vmatprep.subr.bf16.mxu0 0
  %367 = vmatpush1.bf16.msra.mxu0 0
  %368 = vmatprep.subr.bf16.mxu0 0
  %369 = vmatpush1.bf16.msra.mxu0 0
  %370 = vmatprep.subr.bf16.mxu0 0
  %371 = vmatpush1.bf16.msra.mxu0 0
  %372 = vmatprep.subr.bf16.mxu0 0
  %373 = vmatpush1.bf16.msra.mxu0 0
  %374 = vmatprep.subr.bf16.mxu0 0
  %375 = vmatpush1.bf16.msra.mxu0 0
  %376 = vmatprep.mubr.bf16.mxu0 0
  %377 = vmatmul.mubr.bf16.gmra.mrb[0].mxu0 %v301
  %v378 = vpop.f32.mrb[0].mxu0
  %v379 = vadd.f32 %v338, %v378
  %v380 = vpop.f32.mrb[0].mxu0
  %v381 = vadd.f32 %v340, %v380
  %v382 = vpop.f32.mrb[0].mxu0
  %v383 = vpop.f32.mrb[0].mxu0
  %384 = vdwg.mxu0
  %v385 = vmax.f32 %v379, 0.0
  %v386 = vmax.f32 %v381, 0.0
  %v387 = vpack.c.bf16 %v385, %v385
  %v388 = vpack.c.bf16 %v386, %v386
  %v389 = vld [vmem:[%s3] sm:$0xf]
  %v390 = vld [vmem:[%s3 + $0x4] sm:$0xf]
  %v391 = vld [vmem:[%s3 + $0x8] sm:$0xf]
  %v392 = vld [vmem:[%s3 + $0xc] sm:$0xf]
  %v393 = vld [vmem:[%s3 + $0x10] sm:$0xf]
  %v394 = vld [vmem:[%s3 + $0x14] sm:$0xf]
  %v395 = vld [vmem:[%s3 + $0x18] sm:$0xf]
  %v396 = vld [vmem:[%s3 + $0x1c] sm:$0xf]
  %v397 = vld [vmem:[%s3 + $0x20] sm:$0xf]
  %v398 = vld [vmem:[%s3 + $0x24] sm:$0xf]
  %v399 = vld [vmem:[%s3 + $0x28] sm:$0xf]
  %v400 = vld [vmem:[%s3 + $0x2c] sm:$0xf]
  %v401 = vld [vmem:[%s3 + $0x30] sm:$0xf]
  %v402 = vld [vmem:[%s3 + $0x34] sm:$0xf]
  %v403 = vld [vmem:[%s3 + $0x38] sm:$0xf]
  %v404 = vld [vmem:[%s3 + $0x3c] sm:$0xf]
  %v405 = vld [vmem:[%s3 + $0x40] sm:$0xf]
  %v406 = vld [vmem:[%s3 + $0x44] sm:$0xf]
  %v407 = vld [vmem:[%s3 + $0x48] sm:$0xf]
  %v408 = vld [vmem:[%s3 + $0x4c] sm:$0xf]
  %v409 = vld [vmem:[%s3 + $0x50] sm:$0xf]
  %v410 = vld [vmem:[%s3 + $0x54] sm:$0xf]
  %v411 = vld [vmem:[%s3 + $0x58] sm:$0x3]
  %v412 = vld [vmem:[%s4] sm:$0x1]
  %v414 = vlaneseq
  %v415 = vshrl.u32 %v414, 7
  %v416 = vsub.s32 0, %v415
  %v417 = vrot.slane %v412, %v416
  %v442 = vunpack.c.l.b16 %v389
  %v443 = vunpack.c.l.b16 %v390
  %v444 = vunpack.c.l.b16 %v391
  %v445 = vunpack.c.l.b16 %v392
  %v446 = vunpack.c.l.b16 %v393
  %v447 = vunpack.c.l.b16 %v394
  %v448 = vunpack.c.l.b16 %v395
  %v449 = vunpack.c.l.b16 %v396
  %v450 = vunpack.c.l.b16 %v397
  %v451 = vunpack.c.l.b16 %v398
  %v452 = vunpack.c.l.b16 %v399
  %v453 = vunpack.c.l.b16 %v400
  %v454 = vunpack.c.l.b16 %v401
  %v455 = vunpack.c.l.b16 %v402
  %v456 = vunpack.c.l.b16 %v403
  %v457 = vunpack.c.l.b16 %v404
  %v458 = vunpack.c.l.b16 %v405
  %v459 = vunpack.c.l.b16 %v406
  %v460 = vunpack.c.l.b16 %v407
  %v461 = vunpack.c.l.b16 %v408
  %v462 = vunpack.c.l.b16 %v409
  %v463 = vunpack.c.l.b16 %v410
  %v464 = vunpack.c.l.b16 %v411
  %v465 = vpack.c.b16 %v443, %v442
  %v466 = vpack.c.b16 %v445, %v444
  %v467 = vpack.c.b16 %v447, %v446
  %v468 = vpack.c.b16 %v449, %v448
  %v469 = vpack.c.b16 %v451, %v450
  %v470 = vpack.c.b16 %v453, %v452
  %v471 = vpack.c.b16 %v455, %v454
  %v472 = vpack.c.b16 %v457, %v456
  %v473 = vpack.c.b16 %v459, %v458
  %v474 = vpack.c.b16 %v461, %v460
  %v475 = vpack.c.b16 %v463, %v462
  %v476 = vpack.c.b16 %v464, %v464
  %vm488 = vcmask 424960
  %v490 = vsel %vm488, %v388, 0
  %vm492 = vcmask 1041408
  %v494 = vsel %vm492, %v476, 0
  %496 = vmatprep.subr.bf16.mxu0 0
  %497 = vmatpush1.bf16.msra.mxu0 %v465
  %498 = vmatprep.subr.bf16.mxu0 0
  %499 = vmatpush1.bf16.msra.mxu0 %v466
  %500 = vmatprep.subr.bf16.mxu0 0
  %501 = vmatpush1.bf16.msra.mxu0 %v467
  %502 = vmatprep.subr.bf16.mxu0 0
  %503 = vmatpush1.bf16.msra.mxu0 %v468
  %504 = vmatprep.subr.bf16.mxu0 0
  %505 = vmatpush1.bf16.msra.mxu0 %v469
  %506 = vmatprep.subr.bf16.mxu0 0
  %507 = vmatpush1.bf16.msra.mxu0 %v470
  %508 = vmatprep.subr.bf16.mxu0 0
  %509 = vmatpush1.bf16.msra.mxu0 %v471
  %510 = vmatprep.subr.bf16.mxu0 0
  %511 = vmatpush1.bf16.msra.mxu0 %v472
  %512 = vmatprep.subr.bf16.mxu0 0
  %513 = vmatpush1.bf16.msra.mxu0 %v473
  %514 = vmatprep.subr.bf16.mxu0 0
  %515 = vmatpush1.bf16.msra.mxu0 %v474
  %516 = vmatprep.subr.bf16.mxu0 0
  %517 = vmatpush1.bf16.msra.mxu0 %v475
  %518 = vmatprep.subr.bf16.mxu0 0
  %519 = vmatpush1.bf16.msra.mxu0 %v494
  %520 = vmatprep.subr.bf16.mxu0 0
  %521 = vmatpush1.bf16.msra.mxu0 0
  %522 = vmatprep.subr.bf16.mxu0 0
  %523 = vmatpush1.bf16.msra.mxu0 0
  %524 = vmatprep.subr.bf16.mxu0 0
  %525 = vmatpush1.bf16.msra.mxu0 0
  %526 = vmatprep.subr.bf16.mxu0 0
  %527 = vmatpush1.bf16.msra.mxu0 0
  %528 = vmatprep.mubr.bf16.mxu0 %v490
  %529 = vmatmul.mubr.bf16.gmra.mrb[0].mxu0 %v387
  %v530 = vpop.f32.mrb[0].mxu0
  %v531 = vadd.f32 %v417, %v530
  %v532 = vpop.f32.mrb[0].mxu0
  %v533 = vpop.f32.mrb[0].mxu0
  %v534 = vpop.f32.mrb[0].mxu0
  %535 = vdwg.mxu0
  %v536 = vmax.f32 %v531, 0.0
  %v537 = vpack.c.bf16 %v536, %v536
  %v538 = vld [vmem:[%s5] sm:$0xf]
  %v539 = vld [vmem:[%s5 + $0x4] sm:$0xf]
  %v540 = vld [vmem:[%s5 + $0x8] sm:$0xf]
  %v541 = vld [vmem:[%s5 + $0xc] sm:$0xf]
  %v542 = vld [vmem:[%s5 + $0x10] sm:$0xf]
  %v543 = vld [vmem:[%s5 + $0x14] sm:$0xf]
  %v544 = vld [vmem:[%s5 + $0x18] sm:$0xf]
  %v545 = vld [vmem:[%s5 + $0x1c] sm:$0x3]
  %v546 = vld [vmem:[%s6] sm:$0x1]
  %v548 = vlaneseq
  %v549 = vshrl.u32 %v548, 7
  %v550 = vsub.s32 0, %v549
  %v551 = vrot.slane %v546, %v550
  %v561 = vunpack.c.l.b16 %v538
  %v562 = vunpack.c.l.b16 %v539
  %v563 = vunpack.c.l.b16 %v540
  %v564 = vunpack.c.l.b16 %v541
  %v565 = vunpack.c.l.b16 %v542
  %v566 = vunpack.c.l.b16 %v543
  %v567 = vunpack.c.l.b16 %v544
  %v568 = vunpack.c.l.b16 %v545
  %v569 = vpack.c.b16 %v562, %v561
  %v570 = vpack.c.b16 %v564, %v563
  %v571 = vpack.c.b16 %v566, %v565
  %v572 = vpack.c.b16 %v568, %v567
  %vm576 = vcmask 490496
  %v578 = vsel %vm576, %v537, 0
  %vm580 = vcmask 1045504
  %v582 = vsel %vm580, %v572, 0
  %584 = vmatprep.subr.bf16.mxu0 0
  %585 = vmatpush1.bf16.msra.mxu0 %v569
  %586 = vmatprep.subr.bf16.mxu0 0
  %587 = vmatpush1.bf16.msra.mxu0 %v570
  %588 = vmatprep.subr.bf16.mxu0 0
  %589 = vmatpush1.bf16.msra.mxu0 %v571
  %590 = vmatprep.subr.bf16.mxu0 0
  %591 = vmatpush1.bf16.msra.mxu0 %v582
  %592 = vmatprep.subr.bf16.mxu0 0
  %593 = vmatpush1.bf16.msra.mxu0 0
  %594 = vmatprep.subr.bf16.mxu0 0
  %595 = vmatpush1.bf16.msra.mxu0 0
  %596 = vmatprep.subr.bf16.mxu0 0
  %597 = vmatpush1.bf16.msra.mxu0 0
  %598 = vmatprep.subr.bf16.mxu0 0
  %599 = vmatpush1.bf16.msra.mxu0 0
  %600 = vmatprep.subr.bf16.mxu0 0
  %601 = vmatpush1.bf16.msra.mxu0 0
  %602 = vmatprep.subr.bf16.mxu0 0
  %603 = vmatpush1.bf16.msra.mxu0 0
  %604 = vmatprep.subr.bf16.mxu0 0
  %605 = vmatpush1.bf16.msra.mxu0 0
  %606 = vmatprep.subr.bf16.mxu0 0
  %607 = vmatpush1.bf16.msra.mxu0 0
  %608 = vmatprep.subr.bf16.mxu0 0
  %609 = vmatpush1.bf16.msra.mxu0 0
  %610 = vmatprep.subr.bf16.mxu0 0
  %611 = vmatpush1.bf16.msra.mxu0 0
  %612 = vmatprep.subr.bf16.mxu0 0
  %613 = vmatpush1.bf16.msra.mxu0 0
  %614 = vmatprep.subr.bf16.mxu0 0
  %615 = vmatpush1.bf16.msra.mxu0 0
  %616 = vmatprep.mubr.bf16.mxu0 0
  %617 = vmatmul.mubr.bf16.gmra.mrb[0].mxu0 %v578
  %v618 = vpop.f32.mrb[0].mxu0
  %v619 = vadd.f32 %v551, %v618
  %v620 = vpop.f32.mrb[0].mxu0
  %v621 = vpop.f32.mrb[0].mxu0
  %v622 = vpop.f32.mrb[0].mxu0
  %623 = vdwg.mxu0
  %v624 = vmax.f32 %v619, 0.0
  %v625 = vld [vmem:[%s7] sm:$0x1]
  %v627 = vlaneseq
  %v628 = vshrl.u32 %v627, 7
  %v629 = vsub.s32 0, %v628
  %v630 = vrot.slane %v625, %v629
  %v632 = vmul.f32 %v624, %v630
  %vm633 = vcmask 244736
  %v634 = vsel %vm633, %v632, 0.0
  %635 = vadd.xlane.f32.xlu0 %v634
  %v636 = vpop.xlane.xlu0 %635
  %v637 = vld [vmem:[#allocation2] sm:$0x1]
  %v639 = vlaneseq
  %v640 = vshrl.u32 %v639, 7
  %v641 = vsub.s32 0, %v640
  %v642 = vrot.slane %v637, %v641
  %v644 = vadd.f32 %v636, %v642
  %v645 = vsub.f32 0.0, %v644
  %v646 = vmul.f32 %v645, 1.442695
  %v647 = vpow.pop %v646
  %v648 = vadd.f32 %v647, 1.0
  %v649 = vrcp.pop %v648
  %vm650 = vcmask 7168
  %651 = vst.msk [vmem:[%s9] sm:$0xff] %vm650, %v649
  // Predicated region
  $region38: #{tpu_custom_call.1} parent=0 // pred_check
    _
  $region39: #{tpu_custom_call.1} parent=0 // pred_check_branch
    %653 = sbr.rel (0) target = $region41
  $region40: #{tpu_custom_call.1} parent=0 // pred_region
    _
  $region41: #{tpu_custom_call.1} parent=0 // pred_fallthru
    _
  // Predicated region
  $region42: #{tpu_custom_call.1} parent=0 // pred_check
    _
  $region43: #{tpu_custom_call.1} parent=0 // pred_check_branch
    %655 = sbr.rel (0) target = $region45
  $region44: #{tpu_custom_call.1} parent=0 // pred_region
    _
  $region45: #{tpu_custom_call.1} parent=0 // pred_fallthru
    _

</llo_original>
